<compile_context>
chip_gen: v7x
topology: tpu7x:2x2x1
jax: 0.10.0
libtpu: 0.0.40
codegen_flags: <defaults>
</compile_context>

<pallas_src>
import functools

import jax
import jax.numpy as jnp
from jax import lax
from jax.experimental import pallas as pl
from jax.experimental.pallas import tpu as pltpu

_MIB = 1024 * 1024


def _round_up(x, m):
    return (x + m - 1) // m * m


def _sublane_pack(itemsize):
    # Second-to-last dim pads to 8 sublanes for f32, 16 for bf16, 32 for int8.
    return 8 * max(1, 4 // int(itemsize))


def _vmem_capacity_bytes():
    try:
        info = pltpu.get_tpu_info()
        for name in ("vmem_capacity_bytes", "vmem_bytes", "vmem_size_bytes"):
            v = getattr(info, name, None)
            if v:
                return int(v)
    except Exception:
        pass
    return 64 * _MIB  # conservative (v7x-sized) fallback


def _budgets():
    """(physical_vmem, scoped_vmem_limit, max_bytes_per_lane_tile)."""
    cap = _vmem_capacity_bytes()
    if cap >= 96 * _MIB:              # v5e / v6e: 128 MiB physical VMEM
        return cap, 64 * _MIB, 6 * _MIB
    # v7x: 64 MiB per TensorCore; faster HBM favours big tiles but the VMEM
    # ceiling is lower, so cap blocks at ~4 MiB under a 48 MiB scoped limit.
    return cap, 48 * _MIB, 4 * _MIB


def _pick_lane_tile(S, row_bytes, max_block_bytes):
    # Largest multiple of 128 dividing S with row_bytes*ts <= budget.
    # Full-extent last dim is always legal, so fall back to S when S%128 != 0
    # (callers only allow that when the full block is small).
    if S % 128 != 0:
        return S
    ts_cap = max(128, (max_block_bytes // max(1, row_bytes)) // 128 * 128)
    ts = min(S, ts_cap)
    while ts > 128 and S % ts != 0:
        ts -= 128
    return ts


# --------------------------- two-pass kernels -------------------------------

def _stats_kernel(bias_ref, std_ref, x_ref, scale_ref, shift_ref,
                  sum_ref, sq_ref, *, eps, inv_count):
    # x_ref block: (cn, C, ts) -- one lane tile of one ghost chunk.
    s = pl.program_id(1)

    @pl.when(s == 0)
    def _():
        sum_ref[...] = jnp.zeros_like(sum_ref)
        sq_ref[...] = jnp.zeros_like(sq_ref)

    x = x_ref[...].astype(jnp.float32)            # (cn, C, ts)
    xs = jnp.sum(x, axis=0)                       # (C, ts)  VPU adds over cn
    x2s = jnp.sum(x * x, axis=0)                  # (C, ts)
    # Per-tile XLU lane reduce; hidden under HBM DMA (kernel is mem-bound).
    sum_ref[...] += jnp.sum(xs, axis=1, keepdims=True)   # (C, 1)
    sq_ref[...] += jnp.sum(x2s, axis=1, keepdims=True)   # (C, 1)

    @pl.when(s == pl.num_programs(1) - 1)
    def _():
        mean = sum_ref[...] * inv_count
        var = jnp.maximum(sq_ref[...] * inv_count - mean * mean, 0.0)
        r = lax.rsqrt(var + eps)
        std = std_ref[0]
        scale_ref[...] = r * std                          # (C, 1)
        shift_ref[...] = (bias_ref[0] - mean * r) * std   # (C, 1)


def _apply_kernel(x_ref, scale_ref, shift_ref, o_ref):
    # x_ref block: (cn, C, ts); scale/shift: (C, 1) broadcast over cn, ts.
    x = x_ref[...].astype(jnp.float32)
    o_ref[...] = (x * scale_ref[...] + shift_ref[...]).astype(o_ref.dtype)


# --------------------------- fused kernel -----------------------------------

def _fused_kernel(bias_ref, std_ref, x_ref, o_ref, sum_ref, sq_ref, *,
                  eps, inv_count, ts, n_inner):
    # Whole ghost chunk (cn, C, S) is VMEM-resident; stats + apply in one call.
    sum_ref[...] = jnp.zeros_like(sum_ref)
    sq_ref[...] = jnp.zeros_like(sq_ref)

    # Static unroll over lane tiles keeps f32 temporaries to one tile
    # instead of the whole chunk (n_inner is small by construction).
    for j in range(n_inner):
        blk = x_ref[:, :, pl.ds(j * ts, ts)].astype(jnp.float32)  # (cn, C, ts)
        xs = jnp.sum(blk, axis=0)
        x2 = jnp.sum(blk * blk, axis=0)
        sum_ref[...] += jnp.sum(xs, axis=1, keepdims=True)
        sq_ref[...] += jnp.sum(x2, axis=1, keepdims=True)

    mean = sum_ref[...] * inv_count
    var = jnp.maximum(sq_ref[...] * inv_count - mean * mean, 0.0)
    r = lax.rsqrt(var + eps)
    std = std_ref[0]
    scale = r * std                                # (C, 1)
    shift = (bias_ref[0] - mean * r) * std         # (C, 1)

    for j in range(n_inner):
        blk = x_ref[:, :, pl.ds(j * ts, ts)].astype(jnp.float32)
        o_ref[:, :, pl.ds(j * ts, ts)] = (blk * scale + shift).astype(o_ref.dtype)


# --------------------------- wrapper -----------------------------------------

def ghost_batch_norm_3d(x, bias, std, *, divider=4, eps=1e-5, fused=None,
                        donate_input=False, _force_pad=False,
                        _fused_inner_budget_bytes=2 * _MIB):
    N, C, D, H, W = x.shape
    assert N % divider == 0, "batch must be divisible by divider"
    cn = N // divider
    S = D * H * W

    itemsize = jnp.dtype(x.dtype).itemsize
    C_pad = _round_up(C, _sublane_pack(itemsize))
    cap, vmem_limit, max_block = _budgets()

    # Free reshape: NCDHW is contiguous, so no data movement / transpose.
    xr = x.reshape(divider, cn, C, S)

    # S % 128 != 0: a full-extent lane block is fine while small; otherwise
    # zero-pad the lane axis to a multiple of 128 (zeros add nothing to
    # sum / sum-of-squares; inv_count below uses the real element count).
    row_bytes = cn * C_pad * itemsize
    need_pad = (S % 128 != 0) and (_force_pad or row_bytes * S > max_block)
    if need_pad:
        S_work = _round_up(S, 128)
        xr = jnp.pad(xr, ((0, 0), (0, 0), (0, 0), (0, S_work - S)))
    else:
        S_work = S

    inv_count = 1.0 / float(cn * S)      # real per-(chunk, channel) count
    total = divider * cn * C * S_work

    bias_s = bias.reshape(1).astype(jnp.float32)
    std_s = std.reshape(1).astype(jnp.float32)
    smem_spec = pl.BlockSpec(memory_space=pltpu.MemorySpace.SMEM)

    # Padded VMEM footprint of one ghost chunk.
    chunk_bytes = cn * C_pad * S_work * itemsize
    if fused is None:
        # Fused path holds ~4x chunk (double-buffered in + out) plus slack.
        fused = 4 * chunk_bytes + 4 * _MIB <= cap - 24 * _MIB

    if fused:
        # ---- single pass: stats + finalize + apply on the resident chunk ----
        ts_in = _pick_lane_tile(S_work, cn * C_pad * 4, _fused_inner_budget_bytes)
        n_inner = S_work // ts_in
        x_spec_f = pl.BlockSpec((None, cn, C, S_work), lambda g: (g, 0, 0, 0))
        kern = functools.partial(_fused_kernel, eps=float(eps),
                                 inv_count=inv_count, ts=ts_in, n_inner=n_inner)
        vmem_limit_f = min(cap - 8 * _MIB,
                           max(32 * _MIB, 4 * chunk_bytes + 16 * _MIB))
        out = pl.pallas_call(
            kern,
            out_shape=jax.ShapeDtypeStruct((divider, cn, C, S_work), x.dtype),
            grid_spec=pltpu.PrefetchScalarGridSpec(
                num_scalar_prefetch=0,
                grid=(divider,),
                in_specs=[smem_spec, smem_spec, x_spec_f],
                out_specs=x_spec_f,
                scratch_shapes=[pltpu.VMEM((C, 1), jnp.float32),
                                pltpu.VMEM((C, 1), jnp.float32)],
            ),
            compiler_params=pltpu.CompilerParams(
                dimension_semantics=("parallel",),
                vmem_limit_bytes=vmem_limit_f),
            cost_estimate=pl.CostEstimate(
                flops=5 * total, transcendentals=divider * C,
                bytes_accessed=2 * total * itemsize),
            input_output_aliases=({2: 0} if donate_input else {}),
        )(bias_s, std_s, xr)
    else:
        # ---- two pipelined sweeps over HBM (big chunks) ----
        ts = _pick_lane_tile(S_work, row_bytes, max_block)
        n_s = S_work // ts
        x_spec = pl.BlockSpec((None, cn, C, ts), lambda g, s: (g, 0, 0, s))
        stat_spec = pl.BlockSpec((None, C, 1), lambda g, s: (g, 0, 0))

        stats_kernel = functools.partial(
            _stats_kernel, eps=float(eps), inv_count=inv_count)
        scale, shift = pl.pallas_call(
            stats_kernel,
            out_shape=(jax.ShapeDtypeStruct((divider, C, 1), jnp.float32),
                       jax.ShapeDtypeStruct((divider, C, 1), jnp.float32)),
            grid_spec=pltpu.PrefetchScalarGridSpec(
                num_scalar_prefetch=0,
                grid=(divider, n_s),
                in_specs=[smem_spec, smem_spec, x_spec],
                out_specs=[stat_spec, stat_spec],
                scratch_shapes=[pltpu.VMEM((C, 1), jnp.float32),
                                pltpu.VMEM((C, 1), jnp.float32)],
            ),
            compiler_params=pltpu.CompilerParams(
                dimension_semantics=("parallel", "arbitrary"),
                vmem_limit_bytes=vmem_limit),
            cost_estimate=pl.CostEstimate(
                flops=3 * total, transcendentals=divider * C,
                bytes_accessed=total * itemsize),
        )(bias_s, std_s, xr)

        out = pl.pallas_call(
            _apply_kernel,
            out_shape=jax.ShapeDtypeStruct((divider, cn, C, S_work), x.dtype),
            grid_spec=pltpu.PrefetchScalarGridSpec(
                num_scalar_prefetch=0,
                grid=(divider, n_s),
                in_specs=[x_spec, stat_spec, stat_spec],
                out_specs=x_spec,
            ),
            compiler_params=pltpu.CompilerParams(
                dimension_semantics=("parallel", "parallel"),
                vmem_limit_bytes=vmem_limit),
            cost_estimate=pl.CostEstimate(
                flops=2 * total, transcendentals=0,
                bytes_accessed=2 * total * itemsize),
            input_output_aliases=({0: 0} if donate_input else {}),
        )(xr, scale, shift)

    if need_pad:
        out = out[..., :S]
    return out.reshape(N, C, D, H, W)


def _reference(x, bias, std, *, divider=4, eps=1e-5):
    # Pure-JAX reference matching the PyTorch module (training-mode BN).
    chunks = jnp.split(x, divider, axis=0)
    res = []
    for c in chunks:
        mean = jnp.mean(c, axis=(0, 2, 3, 4), keepdims=True)
        var = jnp.mean(jnp.square(c - mean), axis=(0, 2, 3, 4), keepdims=True)
        res.append((c - mean) / jnp.sqrt(var + eps))
    y = jnp.concatenate(res, axis=0)
    return (y + bias[0]) * std[0]


if __name__ == "__main__":
    key = jax.random.PRNGKey(0)
    k1, k2 = jax.random.split(key)

    # nn.Parameter shapes (1,); non-default so (y + bias) * std is exercised.
    bias = jnp.full((1,), 0.25, dtype=jnp.float32)
    std = jnp.full((1,), 1.5, dtype=jnp.float32)

    # Case 1: lane-friendly spatial (S = 256); auto -> fused single-pass path.
    N, C, D, H, W = 8, 4, 4, 8, 8                 # divider=4 -> ghost batches of 2
    x = jax.random.normal(k1, (N, C, D, H, W), dtype=jnp.float32)
    ref = _reference(x, bias, std, divider=4, eps=1e-5)

    out_f = jax.block_until_ready(ghost_batch_norm_3d(x, bias, std, divider=4))
    assert out_f.shape == x.shape and out_f.dtype == x.dtype
    assert jnp.allclose(out_f, ref, atol=1e-4, rtol=1e-4), (
        float(jnp.max(jnp.abs(out_f - ref))))

    # Case 1b: fused path with multiple inner lane tiles (tiny inner budget).
    out_ft = jax.block_until_ready(ghost_batch_norm_3d(
        x, bias, std, divider=4, _fused_inner_budget_bytes=8 * 1024))
    assert jnp.allclose(out_ft, ref, atol=1e-4, rtol=1e-4), (
        float(jnp.max(jnp.abs(out_ft - ref))))

    # Case 2: force the two-pass (stats + apply) fallback path.
    out_2p = jax.block_until_ready(ghost_batch_norm_3d(
        x, bias, std, divider=4, fused=False))
    assert jnp.allclose(out_2p, ref, atol=1e-4, rtol=1e-4), (
        float(jnp.max(jnp.abs(out_2p - ref))))

    # Case 3: spatial size not a multiple of 128 (S = 105), both paths,
    # plus the zero-pad-to-128 fallback.
    N2, C2, D2, H2, W2 = 4, 3, 3, 5, 7
    x2 = jax.random.normal(k2, (N2, C2, D2, H2, W2), dtype=jnp.float32)
    ref2 = _reference(x2, bias, std, divider=2, eps=1e-5)
    outs2 = [
        ghost_batch_norm_3d(x2, bias, std, divider=2),
        ghost_batch_norm_3d(x2, bias, std, divider=2, fused=False),
        ghost_batch_norm_3d(x2, bias, std, divider=2, _force_pad=True),
    ]
    for o in outs2:
        o = jax.block_until_ready(o)
        assert o.shape == x2.shape and o.dtype == x2.dtype
        assert jnp.allclose(o, ref2, atol=1e-4, rtol=1e-4), (
            float(jnp.max(jnp.abs(o - ref2))))

    print("KERNEL_OK")
</pallas_src>

<mosaic_0001>
module attributes {stable_mosaic.version = 11 : i64} {
  func.func @_fused_kernel(%arg0: i32, %arg1: memref<1xf32, #tpu.memory_space<smem>>, %arg2: memref<1xf32, #tpu.memory_space<smem>>, %arg3: memref<1x2x4x256xf32, #tpu.memory_space<vmem>>, %arg4: memref<1x2x4x256xf32, #tpu.memory_space<vmem>>, %arg5: memref<4x1xf32, #tpu.memory_space<vmem>>, %arg6: memref<4x1xf32, #tpu.memory_space<vmem>>) attributes {dimension_semantics = [#tpu.dimension_semantics<parallel>], iteration_bounds = array<i64: 4>, scalar_prefetch = 0 : i64, scratch_operands = 2 : i64, tpu.core_type = #tpu.core_type<tc>, window_params = [{transform_indices = @transform_0, window_bounds = array<i64: 1>}, {transform_indices = @transform_1, window_bounds = array<i64: 1>}, {transform_indices = @transform_2, window_bounds = array<i64: 1, 2, 4, 256>}, {transform_indices = @transform_3, window_bounds = array<i64: 1, 2, 4, 256>}]} {
    %cst = arith.constant 0.000000e+00 : f32
    %0 = vector.broadcast %cst : f32 to vector<4x1xf32>
    %c0 = arith.constant 0 : index
    %c0_0 = arith.constant 0 : index
    %1 = vector.load %arg5[%c0, %c0_0] : memref<4x1xf32, #tpu.memory_space<vmem>>, vector<4x1xf32>
    tpu.vector_store %arg5[%c0, %c0_0], %0 {strides = array<i32>} : memref<4x1xf32, #tpu.memory_space<vmem>>, vector<4x1xf32>,
    %cst_1 = arith.constant 0.000000e+00 : f32
    %2 = vector.broadcast %cst_1 : f32 to vector<4x1xf32>
    %c0_2 = arith.constant 0 : index
    %c0_3 = arith.constant 0 : index
    %3 = vector.load %arg6[%c0_2, %c0_3] : memref<4x1xf32, #tpu.memory_space<vmem>>, vector<4x1xf32>
    tpu.vector_store %arg6[%c0_2, %c0_3], %2 {strides = array<i32>} : memref<4x1xf32, #tpu.memory_space<vmem>>, vector<4x1xf32>,
    %c0_4 = arith.constant 0 : index
    %c0_5 = arith.constant 0 : index
    %c0_6 = arith.constant 0 : index
    %c0_7 = arith.constant 0 : index
    %4 = vector.load %arg3[%c0_4, %c0_5, %c0_6, %c0_7] : memref<1x2x4x256xf32, #tpu.memory_space<vmem>>, vector<1x2x4x256xf32>
    %5 = vector.shape_cast %4 : vector<1x2x4x256xf32> to vector<2x4x256xf32>
    %cst_8 = arith.constant dense<0.000000e+00> : vector<4x256xf32>
    %6 = vector.multi_reduction <add>, %5, %cst_8 [0] : vector<2x4x256xf32> to vector<4x256xf32>
    %7 = arith.mulf %5, %5 : vector<2x4x256xf32>
    %cst_9 = arith.constant dense<0.000000e+00> : vector<4x256xf32>
    %8 = vector.multi_reduction <add>, %7, %cst_9 [0] : vector<2x4x256xf32> to vector<4x256xf32>
    %c0_10 = arith.constant 0 : index
    %c0_11 = arith.constant 0 : index
    %9 = vector.load %arg5[%c0_10, %c0_11] : memref<4x1xf32, #tpu.memory_space<vmem>>, vector<4x1xf32>
    %cst_12 = arith.constant dense<0.000000e+00> : vector<4xf32>
    %10 = vector.multi_reduction <add>, %6, %cst_12 [1] : vector<4x256xf32> to vector<4xf32>
    %11 = vector.shape_cast %10 : vector<4xf32> to vector<4x1xf32>
    %12 = arith.addf %9, %11 : vector<4x1xf32>
    %c0_13 = arith.constant 0 : index
    %c0_14 = arith.constant 0 : index
    %13 = vector.load %arg5[%c0_13, %c0_14] : memref<4x1xf32, #tpu.memory_space<vmem>>, vector<4x1xf32>
    tpu.vector_store %arg5[%c0_13, %c0_14], %12 {strides = array<i32>} : memref<4x1xf32, #tpu.memory_space<vmem>>, vector<4x1xf32>,
    %c0_15 = arith.constant 0 : index
    %c0_16 = arith.constant 0 : index
    %14 = vector.load %arg6[%c0_15, %c0_16] : memref<4x1xf32, #tpu.memory_space<vmem>>, vector<4x1xf32>
    %cst_17 = arith.constant dense<0.000000e+00> : vector<4xf32>
    %15 = vector.multi_reduction <add>, %8, %cst_17 [1] : vector<4x256xf32> to vector<4xf32>
    %16 = vector.shape_cast %15 : vector<4xf32> to vector<4x1xf32>
    %17 = arith.addf %14, %16 : vector<4x1xf32>
    %c0_18 = arith.constant 0 : index
    %c0_19 = arith.constant 0 : index
    %18 = vector.load %arg6[%c0_18, %c0_19] : memref<4x1xf32, #tpu.memory_space<vmem>>, vector<4x1xf32>
    tpu.vector_store %arg6[%c0_18, %c0_19], %17 {strides = array<i32>} : memref<4x1xf32, #tpu.memory_space<vmem>>, vector<4x1xf32>,
    %c0_20 = arith.constant 0 : index
    %c0_21 = arith.constant 0 : index
    %19 = vector.load %arg5[%c0_20, %c0_21] : memref<4x1xf32, #tpu.memory_space<vmem>>, vector<4x1xf32>
    %cst_22 = arith.constant 0.001953125 : f32
    %20 = vector.broadcast %cst_22 : f32 to vector<4x1xf32>
    %21 = arith.mulf %19, %20 : vector<4x1xf32>
    %c0_23 = arith.constant 0 : index
    %c0_24 = arith.constant 0 : index
    %22 = vector.load %arg6[%c0_23, %c0_24] : memref<4x1xf32, #tpu.memory_space<vmem>>, vector<4x1xf32>
    %cst_25 = arith.constant 0.001953125 : f32
    %23 = vector.broadcast %cst_25 : f32 to vector<4x1xf32>
    %24 = arith.mulf %22, %23 : vector<4x1xf32>
    %25 = arith.mulf %21, %21 : vector<4x1xf32>
    %26 = arith.subf %24, %25 : vector<4x1xf32>
    %cst_26 = arith.constant 0.000000e+00 : f32
    %27 = vector.broadcast %cst_26 : f32 to vector<4x1xf32>
    %28 = arith.maximumf %26, %27 : vector<4x1xf32>
    %cst_27 = arith.constant 9.99999974E-6 : f32
    %29 = vector.broadcast %cst_27 : f32 to vector<4x1xf32>
    %30 = arith.addf %28, %29 : vector<4x1xf32>
    %31 = math.rsqrt %30 : vector<4x1xf32>
    %c0_28 = arith.constant 0 : index
    %32 = memref.load %arg2[%c0_28] : memref<1xf32, #tpu.memory_space<smem>>
    %33 = vector.broadcast %32 : f32 to vector<4x1xf32>
    %34 = arith.mulf %31, %33 : vector<4x1xf32>
    %c0_29 = arith.constant 0 : index
    %35 = memref.load %arg1[%c0_29] : memref<1xf32, #tpu.memory_space<smem>>
    %36 = arith.mulf %21, %31 : vector<4x1xf32>
    %37 = vector.broadcast %35 : f32 to vector<4x1xf32>
    %38 = arith.subf %37, %36 : vector<4x1xf32>
    %39 = vector.broadcast %32 : f32 to vector<4x1xf32>
    %40 = arith.mulf %38, %39 : vector<4x1xf32>
    %c0_30 = arith.constant 0 : index
    %c0_31 = arith.constant 0 : index
    %c0_32 = arith.constant 0 : index
    %c0_33 = arith.constant 0 : index
    %41 = vector.load %arg3[%c0_30, %c0_31, %c0_32, %c0_33] : memref<1x2x4x256xf32, #tpu.memory_space<vmem>>, vector<1x2x4x256xf32>
    %42 = vector.shape_cast %41 : vector<1x2x4x256xf32> to vector<2x4x256xf32>
    %43 = vector.shape_cast %34 : vector<4x1xf32> to vector<1x4x1xf32>
    %44 = vector.broadcast %43 : vector<1x4x1xf32> to vector<2x4x256xf32>
    %45 = arith.mulf %42, %44 : vector<2x4x256xf32>
    %46 = vector.shape_cast %40 : vector<4x1xf32> to vector<1x4x1xf32>
    %47 = vector.broadcast %46 : vector<1x4x1xf32> to vector<2x4x256xf32>
    %48 = arith.addf %45, %47 : vector<2x4x256xf32>
    %c0_34 = arith.constant 0 : index
    %c0_35 = arith.constant 0 : index
    %c0_36 = arith.constant 0 : index
    %c0_37 = arith.constant 0 : index
    %49 = vector.load %arg4[%c0_34, %c0_35, %c0_36, %c0_37] : memref<1x2x4x256xf32, #tpu.memory_space<vmem>>, vector<1x2x4x256xf32>
    %50 = vector.shape_cast %49 : vector<1x2x4x256xf32> to vector<2x4x256xf32>
    %51 = vector.shape_cast %48 : vector<2x4x256xf32> to vector<1x2x4x256xf32>
    tpu.vector_store %arg4[%c0_34, %c0_35, %c0_36, %c0_37], %51 {strides = array<i32>} : memref<1x2x4x256xf32, #tpu.memory_space<vmem>>, vector<1x2x4x256xf32>,
    return
  }
  func.func @transform_0(%arg0: i32) -> i32 {
    %c0_i32 = arith.constant 0 : i32
    %c0_i32_0 = arith.constant 0 : i32
    return %c0_i32 : i32
  }
  func.func @transform_1(%arg0: i32) -> i32 {
    %c0_i32 = arith.constant 0 : i32
    %c0_i32_0 = arith.constant 0 : i32
    return %c0_i32 : i32
  }
  func.func @transform_2(%arg0: i32) -> (i32, i32, i32, i32) {
    %c0_i32 = arith.constant 0 : i32
    %c0_i32_0 = arith.constant 0 : i32
    %c0_i32_1 = arith.constant 0 : i32
    %c0_i32_2 = arith.constant 0 : i32
    return %arg0, %c0_i32, %c0_i32_0, %c0_i32_1 : i32, i32, i32, i32
  }
  func.func @transform_3(%arg0: i32) -> (i32, i32, i32, i32) {
    %c0_i32 = arith.constant 0 : i32
    %c0_i32_0 = arith.constant 0 : i32
    %c0_i32_1 = arith.constant 0 : i32
    %c0_i32_2 = arith.constant 0 : i32
    return %arg0, %c0_i32, %c0_i32_0, %c0_i32_1 : i32, i32, i32, i32
  }
}

</mosaic_0001>

<llo_original>
// kernel: tpu_custom_call.1
$region0: #{tpu_custom_call.1}
  #allocation0 [shape = 'u32[]', space=smem, size = 0x4, offset = 0x4, fixed_abs, tag = 'smem constant byte address 0x4 - core index']
  #allocation1 [shape = 'u32[144,128]{1,0:T(1,128)}', space=vmem, size = 0x12000, scoped, tag = 'internal scratch']
  #allocation2 [shape = 'f32[4,1]{1,0:T(4,128)}', space=vmem, size = 0x800, scoped, tag = 'scratch operand']
  #allocation3 [shape = 'f32[4,1]{1,0:T(4,128)}', space=vmem, size = 0x800, scoped, tag = 'scratch operand']
  #allocation4 [shape = 'f32[1]{0:T(128)S(6)}', space=smem, size = 0x200, scoped, tag = 'scoped memory for tpu_custom_call.1']
  #allocation5 [shape = 'f32[1]{0:T(128)S(6)}', space=smem, size = 0x200, scoped, tag = 'scoped memory for tpu_custom_call.1']
  %s0 = inlined_call_operand.<no memory space> [shape: f32[1], index: 0, kind: input, shape index: {}]
  %s1 = inlined_call_operand.<no memory space> [shape: f32[1], index: 1, kind: input, shape index: {}]
  %s2 = inlined_call_operand.hbm [shape: f32[4,2,4,256], index: 2, kind: input, shape index: {}]
  %s3 = inlined_call_operand.hbm [shape: f32[4,2,4,256], index: 3, kind: output, shape index: {}]
  %s4 = sld [smem:[#allocation0]]
  $region49: #{tpu_custom_call.1} parent=0
    _
  %s6 = ssub.s32 1, %s4
  %s7 = scalar_select 0, %s6, %s4
  %8 = sst [smem:[#allocation4]] %s0
  %9 = sst [smem:[#allocation5]] %s1
  $region1: #{tpu_custom_call.1} parent=0
    #allocation6 [shape = 'u8[16384]{0}', space=vmem, size = 0x4000, scoped, tag = 'input window, operand 2']
    #allocation7 [shape = 's32[2]{0}', space=sflag, size = 0x8, scoped, tag = 'scoped memory for tpu_custom_call.1']
    #allocation8 [shape = 's32[2]{0}', space=sflag, size = 0x8, scoped, tag = 'scoped memory for tpu_custom_call.1']
    #allocation9 [shape = 'u8[16384]{0}', space=vmem, size = 0x4000, scoped, tag = 'output window, operand 0']
    %10 = vsyncpa [#allocation7], 0
    %s11 = scalar_lea.sflag [#allocation7], 1
    %12 = vsyncpa %s11, 0
    %13 = vsyncpa [#allocation8], 0
    %s14 = scalar_lea.sflag [#allocation8], 1
    %15 = vsyncpa %s14, 0
    loop: start=0, step=1, limit=6
    $region2: #{tpu_custom_call.1} parent=1 // loop_pre_header
      _
    $region3: #{tpu_custom_call.1} parent=1 // loop_header
      %s17 = sphi 0, %s21
      %p18 = scmp.ge.s32.totalorder %s17, 6
      %s25 = sphi 0, %s25
      %s27 = sphi 0, %s25
      %s28 = sphi 0, %s27
      %s42 = sphi 0, %s28
      %s46 = sphi 0, %s46
      %s48 = sphi 0, %s46
      %s49 = sphi 0, %s48
      %s63 = sphi 0, %s49
      %s69 = sphi 0, %s71
      %s72 = sphi 0, %s69
      %s73 = sphi 0, %s72
      %s89 = sphi 0, %s73
      %s95 = sphi 0, %s97
      %s98 = sphi 0, %s95
      %s99 = sphi 0, %s98
      %s115 = sphi 0, %s99
    $region4: #{tpu_custom_call.1} parent=1 // loop_header_branch
      %20 = sbr.rel (%p18) target = $region8
    $region5: #{tpu_custom_call.1} parent=1 // loop_body
      %s22 = ssub.s32 %s17, 1
      %s23 = ssub.s32 %s17, 2
      %s24 = sadd.s32 %s17, 1
      %s26 = sadd.s32 %s25, 1
      %p29 = scmp.eq.s32.totalorder %s17, 3
      %p30 = scmp.ne.s32.totalorder %s25, %s27
      %p31 = scmp.eq.s32.totalorder %s17, 0
      %p32 = por %p30, %p31
      %p33 = scmp.ne.s32.totalorder %s25, %s27
      %p34 = scmp.eq.s32.totalorder %s22, 3
      %p35 = por %p33, %p34
      %p36 = scmp.ne.s32.totalorder %s27, %s28
      %p37 = scmp.eq.s32.totalorder %s22, 0
      %p38 = por %p36, %p37
      %p39 = scmp.ne.s32.totalorder %s27, %s28
      %p40 = scmp.eq.s32.totalorder %s23, 3
      %p41 = por %p39, %p40
      %p43 = scmp.ne.s32.totalorder %s28, %s42
      %p44 = scmp.eq.s32.totalorder %s23, 0
      %p45 = por %p43, %p44
      %s47 = sadd.s32 %s46, 1
      %p50 = scmp.eq.s32.totalorder %s17, 3
      %p51 = scmp.ne.s32.totalorder %s46, %s48
      %p52 = scmp.eq.s32.totalorder %s17, 0
      %p53 = por %p51, %p52
      %p54 = scmp.ne.s32.totalorder %s46, %s48
      %p55 = scmp.eq.s32.totalorder %s22, 3
      %p56 = por %p54, %p55
      %p57 = scmp.ne.s32.totalorder %s48, %s49
      %p58 = scmp.eq.s32.totalorder %s22, 0
      %p59 = por %p57, %p58
      %p60 = scmp.ne.s32.totalorder %s48, %s49
      %p61 = scmp.eq.s32.totalorder %s23, 3
      %p62 = por %p60, %p61
      %p64 = scmp.ne.s32.totalorder %s49, %s63
      %p65 = scmp.eq.s32.totalorder %s23, 0
      %p66 = por %p64, %p65
      %s67 = ssub.s32 %s17, %s24
      %p68 = scmp.eq.s32.totalorder %s67, 0
      %s70 = sadd.s32 %s69, 1
      %s71 = scalar_select %p68, %s69, %s70
      %p74 = pneg %p68
      %p75 = scmp.eq.s32.totalorder %s17, 3
      %p76 = por %p74, %p75
      %p77 = scmp.ne.s32.totalorder %s69, %s72
      %p78 = scmp.eq.s32.totalorder %s17, 0
      %p79 = por %p77, %p78
      %p80 = scmp.ne.s32.totalorder %s69, %s72
      %p81 = scmp.eq.s32.totalorder %s22, 3
      %p82 = por %p80, %p81
      %p83 = scmp.ne.s32.totalorder %s72, %s73
      %p84 = scmp.eq.s32.totalorder %s22, 0
      %p85 = por %p83, %p84
      %p86 = scmp.ne.s32.totalorder %s72, %s73
      %p87 = scmp.eq.s32.totalorder %s23, 3
      %p88 = por %p86, %p87
      %p90 = scmp.ne.s32.totalorder %s73, %s89
      %p91 = scmp.eq.s32.totalorder %s23, 0
      %p92 = por %p90, %p91
      %s93 = ssub.s32 %s17, %s24
      %p94 = scmp.eq.s32.totalorder %s93, 0
      %s96 = sadd.s32 %s95, 1
      %s97 = scalar_select %p94, %s95, %s96
      %p100 = pneg %p94
      %p101 = scmp.eq.s32.totalorder %s17, 3
      %p102 = por %p100, %p101
      %p103 = scmp.ne.s32.totalorder %s95, %s98
      %p104 = scmp.eq.s32.totalorder %s17, 0
      %p105 = por %p103, %p104
      %p106 = scmp.ne.s32.totalorder %s95, %s98
      %p107 = scmp.eq.s32.totalorder %s22, 3
      %p108 = por %p106, %p107
      %p109 = scmp.ne.s32.totalorder %s98, %s99
      %p110 = scmp.eq.s32.totalorder %s22, 0
      %p111 = por %p109, %p110
      %p112 = scmp.ne.s32.totalorder %s98, %s99
      %p113 = scmp.eq.s32.totalorder %s23, 3
      %p114 = por %p112, %p113
      %p116 = scmp.ne.s32.totalorder %s99, %s115
      %p117 = scmp.eq.s32.totalorder %s23, 0
      %p118 = por %p116, %p117
      %p119 = scmp.le.s32.totalorder 1, %s17
      %p120 = scmp.lt.s32.totalorder %s17, 5
      %p121 = pnand %p119, %p120
      %p122 = pneg %p121
      // Predicated region
      $region9: #{tpu_custom_call.1} parent=5 // pred_check
        _
      $region10: #{tpu_custom_call.1} parent=5 // pred_check_branch
        %124 = sbr.rel (%p121) target = $region12
      $region11: #{tpu_custom_call.1} parent=5 // pred_region
        %s125 = ssub.s32 %s17, 1
        // Predicated region
        $region13: #{tpu_custom_call.1} parent=11 // pred_check
          %p126 = pneg %p38
        $region14: #{tpu_custom_call.1} parent=11 // pred_check_branch
          %128 = sbr.rel (%p126) target = $region16
        $region15: #{tpu_custom_call.1} parent=11 // pred_region
          _
        $region16: #{tpu_custom_call.1} parent=11 // pred_fallthru
          _
        // Predicated region
        $region17: #{tpu_custom_call.1} parent=11 // pred_check
          %p129 = pneg %p59
        $region18: #{tpu_custom_call.1} parent=11 // pred_check_branch
          %131 = sbr.rel (%p129) target = $region20
        $region19: #{tpu_custom_call.1} parent=11 // pred_region
          _
        $region20: #{tpu_custom_call.1} parent=11 // pred_fallthru
          _
      $region12: #{tpu_custom_call.1} parent=5 // pred_fallthru
        _
      %p132 = scmp.lt.s32.totalorder %s17, 4
      // Predicated region
      $region21: #{tpu_custom_call.1} parent=5 // pred_check
        %p133 = pneg %p132
      $region22: #{tpu_custom_call.1} parent=5 // pred_check_branch
        %135 = sbr.rel (%p133) target = $region24
      $region23: #{tpu_custom_call.1} parent=5 // pred_region
        // Predicated region
        $region25: #{tpu_custom_call.1} parent=23 // pred_check
          %p136 = pneg %p79
        $region26: #{tpu_custom_call.1} parent=23 // pred_check_branch
          %138 = sbr.rel (%p136) target = $region28
        $region27: #{tpu_custom_call.1} parent=23 // pred_region
          %s139 = sand.u32 %s69, 1
          %s140 = scalar_lea.sflag [#allocation7], %s139
          %s141 = sand.u32 %s69, 1
          %s142 = smul.addr %s141, 16
          %s143 = scalar_lea.vmem [#allocation6], %s142
          %s145 = ssub.s32 256, 256
          %146 = vsyncadd %s140, %s145
          %s147 = smul.addr %s17, 4
          %s148 = smul.addr %s147, 64
          %s149 = scalar_lea.hbm %s2, %s148
          %s150 = sshll.u32 %s143, 4
          %s151 = int_to_ptr.vmem [resolvable:$true] %s150
          %156 = dma.hbm_to_vmem [thread:$0]  %s149, 256, %s151, %s140, 128, 128, 8
        $region28: #{tpu_custom_call.1} parent=23 // pred_fallthru
          _
      $region24: #{tpu_custom_call.1} parent=5 // pred_fallthru
        _
      %p157 = scmp.le.s32.totalorder 1, %s17
      %p158 = scmp.lt.s32.totalorder %s17, 5
      %p159 = pnand %p157, %p158
      %p160 = pneg %p159
      // Predicated region
      $region29: #{tpu_custom_call.1} parent=5 // pred_check
        _
      $region30: #{tpu_custom_call.1} parent=5 // pred_check_branch
        %162 = sbr.rel (%p159) target = $region32
      $region31: #{tpu_custom_call.1} parent=5 // pred_region
        %s163 = ssub.s32 %s17, 1
        %s164 = sand.u32 %s72, 1
        %s165 = scalar_lea.sflag [#allocation7], %s164
        %s166 = sand.u32 %s72, 1
        %s167 = smul.addr %s166, 16
        %s168 = scalar_lea.vmem [#allocation6], %s167
        // Predicated region
        $region33: #{tpu_custom_call.1} parent=31 // pred_check
          %p169 = pneg %p85
        $region34: #{tpu_custom_call.1} parent=31 // pred_check_branch
          %171 = sbr.rel (%p169) target = $region36
        $region35: #{tpu_custom_call.1} parent=31 // pred_region
          %172 = dma.done %s165, 256
        $region36: #{tpu_custom_call.1} parent=31 // pred_fallthru
          _
        %p173 = pneg %p38
        %p174 = pneg %p35
        %p175 = pneg %p59
        %p176 = pneg %p56
        %s177 = sand.u32 %s72, 1
        %s178 = scalar_lea.sflag [#allocation7], %s177
        %s179 = sand.u32 %s72, 1
        %s180 = smul.addr %s179, 16
        %s181 = scalar_lea.vmem [#allocation6], %s180
        %p182 = pneg %p85
        %p183 = pneg %p82
        %p184 = pneg %p111
        %p185 = pneg %p108
        %s186 = sand.u32 %s98, 1
        %s187 = scalar_lea.sflag [#allocation8], %s186
        %s188 = sand.u32 %s98, 1
        %s189 = smul.addr %s188, 16
        %s190 = scalar_lea.vmem [#allocation9], %s189
        %vm191 = vcmask 3072
        %192 = vst.msk [vmem:[#allocation2] sm:$0xf] %vm191, 0.0
        %193 = vst.msk [vmem:[#allocation3] sm:$0xf] %vm191, 0.0
        %v194 = vld [vmem:[%s168] sm:$0xff]
        %v195 = vld [vmem:[%s168 + $0x8] sm:$0xff]
        %v198 = vcombine.high %v194, %v194
        %v199 = vcombine.high %v195, %v195
        %vm202 = vcmask 1043456
        %v203 = vsel %vm202, %v194, 0.0
        %v204 = vsel %vm202, %v195, 0.0
        %v205 = vadd.f32 %v203, %v204
        %v206 = vsel %vm202, %v198, 0.0
        %v207 = vsel %vm202, %v199, 0.0
        %v208 = vadd.f32 %v206, %v207
        %v209 = vmul.f32 %v194, %v194
        %v210 = vmul.f32 %v195, %v195
        %v213 = vcombine.high %v209, %v209
        %v214 = vcombine.high %v210, %v210
        %v217 = vsel %vm202, %v209, 0.0
        %v218 = vsel %vm202, %v210, 0.0
        %v219 = vadd.f32 %v217, %v218
        %v220 = vsel %vm202, %v213, 0.0
        %v221 = vsel %vm202, %v214, 0.0
        %v222 = vadd.f32 %v220, %v221
        %v223 = vld [vmem:[#allocation2] sm:$0xf]
        %v224 = vsel %vm202, %v205, 0.0
        %v225 = vsel %vm202, %v208, 0.0
        %v226 = vadd.f32 %v224, %v225
        %227 = vadd.xlane.f32.xlu0 %v226
        %v228 = vpop.xlane.xlu0 %227
        %v229 = vadd.f32 %v223, %v228
        %230 = vst.msk [vmem:[#allocation2] sm:$0xf] %vm191, %v229
        %v231 = vld [vmem:[#allocation3] sm:$0xf]
        %v232 = vsel %vm202, %v219, 0.0
        %v233 = vsel %vm202, %v222, 0.0
        %v234 = vadd.f32 %v232, %v233
        %235 = vadd.xlane.f32.xlu0 %v234
        %v236 = vpop.xlane.xlu0 %235
        %v237 = vadd.f32 %v231, %v236
        %238 = vst.msk [vmem:[#allocation3] sm:$0xf] %vm191, %v237
        %v239 = vld [vmem:[#allocation2] sm:$0xf]
        %v240 = vmul.f32 %v239, 0.001953125
        %v241 = vld [vmem:[#allocation3] sm:$0xf]
        %v242 = vmul.f32 %v241, 0.001953125
        %v243 = vmul.f32 %v240, %v240
        %v244 = vsub.f32 %v242, %v243
        %v245 = vmax.f32 %v244, 0.0
        %v246 = vadd.f32 %v245, 1e-05
        %v247 = vrsqrt.pop %v246
        %s248 = sld [smem:[#allocation5]]
        %v249 = vstv %s248
        %v250 = vmul.f32 %v247, %v249
        %s251 = sld [smem:[#allocation4]]
        %v252 = vmul.f32 %v240, %v247
        %v253 = vstv %s251
        %v254 = vsub.f32 %v253, %v252
        %v255 = vmul.f32 %v254, %v249
        %v256 = vld [vmem:[%s168] sm:$0xff]
        %v257 = vld [vmem:[%s168 + $0x8] sm:$0xff]
        %259 = vset.pattern.permute.xlu0 0
        %260 = vperm.xlu0 %259, %v250
        %v261 = vpop.permute.xlu0 %260
        %v263 = vunpack.c.l.s4 839922192
        %v264 = vunpack.c.0.s8 %v263
        %v265 = vlaneseq
        %v266 = vshrl.u32 %v265, 7
        %v267 = vsub.s32 %v264, %v266
        %v268 = vrot.slane %v261, %v267
        %v270 = vmul.f32 %v256, %v268
        %v271 = vmul.f32 %v257, %v268
        %273 = vset.pattern.permute.xlu0 0
        %274 = vperm.xlu0 %273, %v255
        %v275 = vpop.permute.xlu0 %274
        %v277 = vunpack.c.l.s4 839922192
        %v278 = vunpack.c.0.s8 %v277
        %v279 = vlaneseq
        %v280 = vshrl.u32 %v279, 7
        %v281 = vsub.s32 %v278, %v280
        %v282 = vrot.slane %v275, %v281
        %v284 = vadd.f32 %v270, %v282
        %v285 = vadd.f32 %v271, %v282
        %286 = vst [vmem:[%s190] sm:$0xff] %v284
        %287 = vst [vmem:[%s190 + $0x8] sm:$0xff] %v285
        %s288 = sand.u32 %s98, 1
        %s289 = scalar_lea.sflag [#allocation8], %s288
        %s290 = sand.u32 %s98, 1
        %s291 = smul.addr %s290, 16
        %s292 = scalar_lea.vmem [#allocation9], %s291
        // Predicated region
        $region37: #{tpu_custom_call.1} parent=31 // pred_check
          %p293 = pneg %p108
        $region38: #{tpu_custom_call.1} parent=31 // pred_check_branch
          %295 = sbr.rel (%p293) target = $region40
        $region39: #{tpu_custom_call.1} parent=31 // pred_region
          %s297 = ssub.s32 256, 256
          %298 = vsyncadd %s289, %s297
          %s299 = smul.addr %s22, 4
          %s300 = smul.addr %s299, 64
          %s301 = scalar_lea.hbm %s3, %s300
          %s302 = sshll.u32 %s292, 4
          %s303 = int_to_ptr.vmem [resolvable:$true] %s302
          %308 = dma.vmem_to_hbm [thread:$0]  %s303, 256, %s301, %s289, 128, 128, 8
        $region40: #{tpu_custom_call.1} parent=31 // pred_fallthru
          _
      $region32: #{tpu_custom_call.1} parent=5 // pred_fallthru
        _
      %p309 = scmp.le.s32.totalorder 2, %s17
      // Predicated region
      $region41: #{tpu_custom_call.1} parent=5 // pred_check
        %p310 = pneg %p309
      $region42: #{tpu_custom_call.1} parent=5 // pred_check_branch
        %312 = sbr.rel (%p310) target = $region44
      $region43: #{tpu_custom_call.1} parent=5 // pred_region
        %s313 = ssub.s32 %s17, 2
        // Predicated region
        $region45: #{tpu_custom_call.1} parent=43 // pred_check
          %p314 = pneg %p114
        $region46: #{tpu_custom_call.1} parent=43 // pred_check_branch
          %316 = sbr.rel (%p314) target = $region48
        $region47: #{tpu_custom_call.1} parent=43 // pred_region
          %s317 = sand.u32 %s99, 1
          %s318 = scalar_lea.sflag [#allocation8], %s317
          %s319 = sand.u32 %s99, 1
          %s320 = smul.addr %s319, 16
          %s321 = scalar_lea.vmem [#allocation9], %s320
          %322 = dma.done %s318, 256
        $region48: #{tpu_custom_call.1} parent=43 // pred_fallthru
          _
      $region44: #{tpu_custom_call.1} parent=5 // pred_fallthru
        _
    $region6: #{tpu_custom_call.1} parent=1 // loop_footer
      %s21 = sadd.s32 1, %s17
    $region7: #{tpu_custom_call.1} parent=1 // loop_footer_branch
      %16 = sbr.rel target = $region3
    $region8: #{tpu_custom_call.1} parent=1 // loop_exit
      _
    %323 = vsyncpa [#allocation7], 1
    %s324 = scalar_lea.sflag [#allocation7], 1
    %325 = vsyncpa %s324, 1
    %326 = vsyncpa [#allocation8], 1
    %s327 = scalar_lea.sflag [#allocation8], 1
    %328 = vsyncpa %s327, 1

</llo_original>
